<compile_context>
chip_gen: v5e
topology: v5e:2x2
jax: 0.10.0
libtpu: 0.0.40
codegen_flags: <defaults>
</compile_context>

<pallas_src>
import numpy as np
import jax
import jax.numpy as jnp
from jax.experimental import pallas as pl
from jax.experimental.pallas import tpu as pltpu


def arc_loss_kernel(x_ref, pos_ref, neg_ref, w_ref, sel_ref, b_ref, loss_ref):
    """All edge types in one invocation (no grid).

    x/pos/neg : (N, E*nemb) bf16, lane-packed (etype e owns lanes [e*nemb, (e+1)*nemb))
    w         : (E*nemb, E*nemb) bf16 block-diagonal (W_e of nn.Bilinear on block e)
    sel       : (E*nemb, E) f32 block-indicator (segmented lane reduce as a matmul)
    b         : (1, E) f32 bias row
    loss      : (1, E) f32 -- one BCEWithLogits loss per edge type
    """
    x = x_ref[...]
    w = w_ref[...]
    # One (N, E*nemb) x (E*nemb, E*nemb) bf16 MXU matmul replaces E tiny dots.
    xw = jnp.dot(x, w, preferred_element_type=jnp.float32)              # (N, E*nemb) f32
    pos = pos_ref[...].astype(jnp.float32)
    neg = neg_ref[...].astype(jnp.float32)
    sel = sel_ref[...]                                                   # (E*nemb, E) f32
    b = b_ref[...]                                                       # (1, E) f32

    # Per-etype bilinear logits: segmented lane-sum of xw*{pos,neg} via a 2nd matmul.
    d1 = jnp.dot(xw * pos, sel, preferred_element_type=jnp.float32) + b  # (N, E) label=1
    d2 = jnp.dot(xw * neg, sel, preferred_element_type=jnp.float32) + b  # (N, E) label=0

    def softplus(z):  # numerically-stable BCEWithLogits pieces; exp/log1p hit the EUP
        return jnp.maximum(z, 0.0) + jnp.log1p(jnp.exp(-jnp.abs(z)))

    n = x.shape[0]
    loss_ref[...] = (jnp.sum(softplus(-d1), axis=0, keepdims=True)
                     + jnp.sum(softplus(d2), axis=0, keepdims=True)) / (2.0 * n)


def arc_forward_packed(x_p, pos_p, neg_p, w_bd, sel, bias):
    """Lane-packed fused ARC loss.

    x_p/pos_p/neg_p: (N, E*nemb) bf16;  w_bd: (E*nemb, E*nemb) bf16;
    sel: (E*nemb, E) f32;  bias: (1, E) f32   ->   (E,) f32 losses.
    """
    N, D = x_p.shape
    E = bias.shape[1]
    cost = pl.CostEstimate(                    # kernel-only flops/bytes (bf16 inputs)
        flops=2 * N * D * D + 4 * N * D * E + 6 * N * D,
        transcendentals=4 * N * E,
        bytes_accessed=3 * N * D * 2 + D * D * 2 + D * E * 4 + 2 * E * 4,
    )
    vmem_full = pl.BlockSpec(memory_space=pltpu.MemorySpace.VMEM)        # whole array
    out = pl.pallas_call(
        arc_loss_kernel,
        out_shape=jax.ShapeDtypeStruct((1, E), jnp.float32),
        in_specs=[vmem_full] * 6,
        out_specs=vmem_full,
        cost_estimate=cost,
    )(x_p, pos_p, neg_p, w_bd, sel, bias)
    return out[0]                                                        # (E,)


# ----------------------------------------------------------------------------
# ARC_trainer glue (graph bookkeeping stays in Python/NumPy; the numeric
# forward -- gathers + lane packing + all edge types + losses -- is one jitted
# call around a single pallas_call).
# ----------------------------------------------------------------------------
class ARCTrainer:
    """JAX port of ARC_trainer.  The DGL graph is replaced by a synthetic edge dict."""

    def __init__(self, etypes, edges, vocab_sizes, nemb=32, batch_size=8, seed=0):
        self.batch_size = batch_size
        self.nemb = nemb
        self.etypes = list(etypes)
        self.vocab_sizes = vocab_sizes          # {'event': n_event, 'entity': n_entity}
        E = len(self.etypes)

        # Static per-etype source / destination embedding tables.
        self.src_keys, self.dst_keys = [], []
        for etype in self.etypes:
            if etype.startswith('Event2Entity'):
                s, d = 'event', 'entity'
            elif etype.startswith('INV_Event2Entity'):
                s, d = 'entity', 'event'
            elif etype.startswith('Entity2Entity'):
                s, d = 'entity', 'entity'
            elif etype.startswith('Event2Event'):
                s, d = 'event', 'event'
            else:
                s, d = None, None
            self.src_keys.append(s)
            self.dst_keys.append(d)

        # One nn.Bilinear(nemb, nemb, 1) per edge type.
        key = jax.random.PRNGKey(seed)
        bound = 1.0 / np.sqrt(nemb)
        w_list, b_list = [], []
        for i in range(E):
            kw, kb = jax.random.split(jax.random.fold_in(key, i))
            w_list.append(jax.random.uniform(kw, (nemb, nemb), jnp.float32, -bound, bound))
            b_list.append(jax.random.uniform(kb, (1,), jnp.float32, -bound, bound))
        self.w_stack = jnp.stack(w_list)                     # (E, nemb, nemb) f32 (fallback/ref)
        self.b_stack = jnp.concatenate(b_list)               # (E,) f32

        # Packed parameters for the fused kernel, built once:
        #   block-diagonal weight (E*nemb, E*nemb) bf16, block-indicator (E*nemb, E) f32,
        #   bias row (1, E) f32.
        w_bd = np.zeros((E * nemb, E * nemb), np.float32)
        sel = np.zeros((E * nemb, E), np.float32)
        for e in range(E):
            w_bd[e * nemb:(e + 1) * nemb, e * nemb:(e + 1) * nemb] = np.asarray(w_list[e])
            sel[e * nemb:(e + 1) * nemb, e] = 1.0
        self.w_blockdiag = jnp.asarray(w_bd, jnp.bfloat16)
        self.sel = jnp.asarray(sel, jnp.float32)
        self.bias_row = self.b_stack.reshape(1, E).astype(jnp.float32)

        # presample: (x_id, pos_id, neg_id) per edge type (uniform negatives).
        rng = np.random.RandomState(seed)
        self.samples = {}
        for etype in self.etypes:
            u, v = edges[etype]
            if etype.startswith('Event2Entity') or etype.startswith('Entity2Entity'):
                cnt = vocab_sizes['entity']
            else:
                cnt = vocab_sizes['event']
            neg = rng.choice(cnt, v.shape[0], True)
            self.samples[etype] = (np.asarray(u), np.asarray(v), np.asarray(neg))
        # TODO(synk): validation-graph samples (val_samples) omitted; the original
        # selects them via an undefined global `vocab_size_dict`.

        src_keys = tuple(self.src_keys)
        dst_keys = tuple(self.dst_keys)

        @jax.jit
        def _fused_forward(emb_event, emb_entity, x_ids, pos_ids, neg_ids, w_bd_, sel_, bias_):
            tables = {'event': emb_event, 'entity': emb_entity}

            def pack(keys, ids):
                rows = [tables[keys[i]][ids[i]] for i in range(E)]         # each (N, nemb)
                return jnp.concatenate(rows, axis=-1).astype(jnp.bfloat16)  # (N, E*nemb)

            x_p = pack(src_keys, x_ids)
            pos_p = pack(dst_keys, pos_ids)
            neg_p = pack(dst_keys, neg_ids)
            return arc_forward_packed(x_p, pos_p, neg_p, w_bd_, sel_, bias_)

        self._fused_forward = _fused_forward

    def forward(self, emb, batch_num=0):
        # Host-side batch slicing kept identical to the original semantics.
        # TODO(synk): the original wrap-around slicing (en can be <= st, en=-1 drops
        # the last edge) is preserved as-is for spec fidelity.
        sliced = []
        for etype in self.etypes:
            x_id, pos_id, neg_id = self.samples[etype]
            st = batch_num * self.batch_size % x_id.shape[0]
            en = (batch_num + 1) * self.batch_size % x_id.shape[0]
            if en == 0 and st == 0:
                en = -1
            sliced.append((x_id[st:en], pos_id[st:en], neg_id[st:en]))

        lengths = {s[0].shape[0] for s in sliced}
        all_typed = all(k is not None for k in self.src_keys)
        if len(lengths) == 1 and next(iter(lengths)) >= 1 and all_typed:
            # Fast path: one jit dispatch, one pallas_call, no grid.
            x_ids = jnp.asarray(np.stack([s[0] for s in sliced]), jnp.int32)
            pos_ids = jnp.asarray(np.stack([s[1] for s in sliced]), jnp.int32)
            neg_ids = jnp.asarray(np.stack([s[2] for s in sliced]), jnp.int32)
            losses = self._fused_forward(emb['event'], emb['entity'],
                                         x_ids, pos_ids, neg_ids,
                                         self.w_blockdiag, self.sel, self.bias_row)
            return [losses[i] for i in range(len(self.etypes))]

        # Fallback (ragged / empty batches): same kernel, E=1, one etype at a time.
        arc_loss = []
        for i, _ in enumerate(self.etypes):
            x_id, pos_id, neg_id = sliced[i]
            if x_id.shape[0] < 1 or self.src_keys[i] is None:
                continue
            x = emb[self.src_keys[i]][jnp.asarray(x_id)].astype(jnp.bfloat16)
            pos = emb[self.dst_keys[i]][jnp.asarray(pos_id)].astype(jnp.bfloat16)
            neg = emb[self.dst_keys[i]][jnp.asarray(neg_id)].astype(jnp.bfloat16)
            loss = arc_forward_packed(
                x, pos, neg,
                self.w_stack[i].astype(jnp.bfloat16),
                jnp.ones((self.nemb, 1), jnp.float32),
                self.b_stack[i].reshape(1, 1))
            arc_loss.append(loss[0])
        return arc_loss


if __name__ == "__main__":
    nemb = 32
    batch_size = 8
    n_event, n_entity = 20, 24
    n_edges = 16  # per etype; batch 0 selects rows [0:8]

    etypes = ["Event2Entity_rel", "INV_Event2Entity_rel",
              "Entity2Entity_rel", "Event2Event_rel"]

    rng = np.random.RandomState(0)
    edges = {}
    for etype in etypes:
        if etype.startswith('Event2Entity'):
            src, dst = n_event, n_entity
        elif etype.startswith('INV_Event2Entity'):
            src, dst = n_entity, n_event
        elif etype.startswith('Entity2Entity'):
            src, dst = n_entity, n_entity
        else:
            src, dst = n_event, n_event
        edges[etype] = (rng.randint(0, src, n_edges), rng.randint(0, dst, n_edges))

    key = jax.random.PRNGKey(0)
    k_ev, k_en = jax.random.split(key)
    emb = {
        'event': jax.random.normal(k_ev, (n_event, nemb), jnp.float32),
        'entity': jax.random.normal(k_en, (n_entity, nemb), jnp.float32),
    }

    trainer = ARCTrainer(etypes, edges,
                         vocab_sizes={'event': n_event, 'entity': n_entity},
                         nemb=nemb, batch_size=batch_size, seed=0)

    losses = trainer.forward(emb, batch_num=0)
    losses = [np.asarray(jax.block_until_ready(l)) for l in losses]
    assert len(losses) == len(etypes)

    # Pure-NumPy reference (Bilinear + BCEWithLogits) for a semantic sanity check.
    emb_np = {k: np.asarray(v, np.float64) for k, v in emb.items()}
    w_np = np.asarray(trainer.w_stack, np.float64)
    b_np = np.asarray(trainer.b_stack, np.float64)

    def _sp(z):
        return np.maximum(z, 0.0) + np.log1p(np.exp(-np.abs(z)))

    for i, etype in enumerate(etypes):
        x_id, pos_id, neg_id = trainer.samples[etype]
        x_id, pos_id, neg_id = x_id[:batch_size], pos_id[:batch_size], neg_id[:batch_size]
        x = emb_np[trainer.src_keys[i]][x_id]
        pos = emb_np[trainer.dst_keys[i]][pos_id]
        neg = emb_np[trainer.dst_keys[i]][neg_id]
        d1 = np.einsum('ni,ij,nj->n', x, w_np[i], pos) + b_np[i]
        d2 = np.einsum('ni,ij,nj->n', x, w_np[i], neg) + b_np[i]
        ref = (_sp(-d1).sum() + _sp(d2).sum()) / (2.0 * d1.shape[0])
        got = float(losses[i])
        assert np.isfinite(got), "non-finite ARC loss"
        assert abs(got - ref) < 5e-2 * max(1.0, abs(ref)), \
            f"loss mismatch for {etype}: {got} vs {ref}"

    print("KERNEL_OK")
</pallas_src>

<mosaic_0001>
module attributes {stable_mosaic.version = 11 : i64} {
  func.func @arc_loss_kernel(%arg0: memref<8x128xbf16, #tpu.memory_space<vmem>>, %arg1: memref<8x128xbf16, #tpu.memory_space<vmem>>, %arg2: memref<8x128xbf16, #tpu.memory_space<vmem>>, %arg3: memref<128x128xbf16, #tpu.memory_space<vmem>>, %arg4: memref<128x4xf32, #tpu.memory_space<vmem>>, %arg5: memref<1x4xf32, #tpu.memory_space<vmem>>, %arg6: memref<1x4xf32, #tpu.memory_space<vmem>>) attributes {dimension_semantics = [], scalar_prefetch = 0 : i64, scratch_operands = 0 : i64, tpu.core_type = #tpu.core_type<tc>} {
    %c0 = arith.constant 0 : index
    %c0_0 = arith.constant 0 : index
    %0 = vector.load %arg0[%c0, %c0_0] : memref<8x128xbf16, #tpu.memory_space<vmem>>, vector<8x128xbf16>
    %c0_1 = arith.constant 0 : index
    %c0_2 = arith.constant 0 : index
    %1 = vector.load %arg3[%c0_1, %c0_2] : memref<128x128xbf16, #tpu.memory_space<vmem>>, vector<128x128xbf16>
    %cst = arith.constant dense<0.000000e+00> : vector<8x128xf32>
    %2 = tpu.matmul %0, %1, %cst {dimension_numbers = #tpu.dot_dimension_numbers<[1], [0], [0], [1], [0, 0, 1, 1], [], []>} : vector<8x128xbf16>, vector<128x128xbf16>, vector<8x128xf32> -> vector<8x128xf32>
    %c0_3 = arith.constant 0 : index
    %c0_4 = arith.constant 0 : index
    %3 = vector.load %arg1[%c0_3, %c0_4] : memref<8x128xbf16, #tpu.memory_space<vmem>>, vector<8x128xbf16>
    %4 = arith.extf %3 : vector<8x128xbf16> to vector<8x128xf32>
    %c0_5 = arith.constant 0 : index
    %c0_6 = arith.constant 0 : index
    %5 = vector.load %arg2[%c0_5, %c0_6] : memref<8x128xbf16, #tpu.memory_space<vmem>>, vector<8x128xbf16>
    %6 = arith.extf %5 : vector<8x128xbf16> to vector<8x128xf32>
    %c0_7 = arith.constant 0 : index
    %c0_8 = arith.constant 0 : index
    %7 = vector.load %arg4[%c0_7, %c0_8] : memref<128x4xf32, #tpu.memory_space<vmem>>, vector<128x4xf32>
    %c0_9 = arith.constant 0 : index
    %c0_10 = arith.constant 0 : index
    %8 = vector.load %arg5[%c0_9, %c0_10] : memref<1x4xf32, #tpu.memory_space<vmem>>, vector<1x4xf32>
    %9 = arith.mulf %2, %4 : vector<8x128xf32>
    %cst_11 = arith.constant dense<0.000000e+00> : vector<8x4xf32>
    %10 = tpu.matmul %9, %7, %cst_11 {dimension_numbers = #tpu.dot_dimension_numbers<[1], [0], [0], [1], [0, 0, 1, 1], [], []>} : vector<8x128xf32>, vector<128x4xf32>, vector<8x4xf32> -> vector<8x4xf32>
    %11 = vector.broadcast %8 : vector<1x4xf32> to vector<8x4xf32>
    %12 = arith.addf %10, %11 : vector<8x4xf32>
    %13 = arith.mulf %2, %6 : vector<8x128xf32>
    %cst_12 = arith.constant dense<0.000000e+00> : vector<8x4xf32>
    %14 = tpu.matmul %13, %7, %cst_12 {dimension_numbers = #tpu.dot_dimension_numbers<[1], [0], [0], [1], [0, 0, 1, 1], [], []>} : vector<8x128xf32>, vector<128x4xf32>, vector<8x4xf32> -> vector<8x4xf32>
    %15 = vector.broadcast %8 : vector<1x4xf32> to vector<8x4xf32>
    %16 = arith.addf %14, %15 : vector<8x4xf32>
    %cst_13 = arith.constant 0.000000e+00 : f32
    %17 = vector.broadcast %cst_13 : f32 to vector<8x4xf32>
    %18 = arith.subf %17, %12 : vector<8x4xf32>
    %cst_14 = arith.constant 0.000000e+00 : f32
    %19 = vector.broadcast %cst_14 : f32 to vector<8x4xf32>
    %20 = arith.maximumf %18, %19 : vector<8x4xf32>
    %21 = math.absf %18 : vector<8x4xf32>
    %cst_15 = arith.constant 0.000000e+00 : f32
    %22 = vector.broadcast %cst_15 : f32 to vector<8x4xf32>
    %23 = arith.subf %22, %21 : vector<8x4xf32>
    %24 = math.exp %23 : vector<8x4xf32>
    %25 = math.log1p %24 : vector<8x4xf32>
    %26 = arith.addf %20, %25 : vector<8x4xf32>
    %cst_16 = arith.constant dense<0.000000e+00> : vector<4xf32>
    %27 = vector.multi_reduction <add>, %26, %cst_16 [0] : vector<8x4xf32> to vector<4xf32>
    %28 = vector.shape_cast %27 : vector<4xf32> to vector<1x4xf32>
    %cst_17 = arith.constant 0.000000e+00 : f32
    %29 = vector.broadcast %cst_17 : f32 to vector<8x4xf32>
    %30 = arith.maximumf %16, %29 : vector<8x4xf32>
    %31 = math.absf %16 : vector<8x4xf32>
    %cst_18 = arith.constant 0.000000e+00 : f32
    %32 = vector.broadcast %cst_18 : f32 to vector<8x4xf32>
    %33 = arith.subf %32, %31 : vector<8x4xf32>
    %34 = math.exp %33 : vector<8x4xf32>
    %35 = math.log1p %34 : vector<8x4xf32>
    %36 = arith.addf %30, %35 : vector<8x4xf32>
    %cst_19 = arith.constant dense<0.000000e+00> : vector<4xf32>
    %37 = vector.multi_reduction <add>, %36, %cst_19 [0] : vector<8x4xf32> to vector<4xf32>
    %38 = vector.shape_cast %37 : vector<4xf32> to vector<1x4xf32>
    %39 = arith.addf %28, %38 : vector<1x4xf32>
    %cst_20 = arith.constant 1.600000e+01 : f32
    %40 = vector.broadcast %cst_20 : f32 to vector<1x4xf32>
    %41 = arith.divf %39, %40 : vector<1x4xf32>
    %c0_21 = arith.constant 0 : index
    %c0_22 = arith.constant 0 : index
    %42 = vector.load %arg6[%c0_21, %c0_22] : memref<1x4xf32, #tpu.memory_space<vmem>>, vector<1x4xf32>
    tpu.vector_store %arg6[%c0_21, %c0_22], %41 {strides = array<i32>} : memref<1x4xf32, #tpu.memory_space<vmem>>, vector<1x4xf32>,
    return
  }
}

</mosaic_0001>

<llo_original>
// kernel: _fused_forward.1
$region0: #{_fused_forward.1}
  #allocation0 [shape = 'u32[]', space=smem, size = 0x4, offset = 0x4, fixed_abs, tag = 'smem constant byte address 0x4 - core index']
  #allocation1 [shape = 'u32[72,128]{1,0:T(1,128)}', space=vmem, size = 0x9000, scoped, tag = 'internal scratch']
  %s0 = inlined_call_operand.vmem [shape: bf16[8,128], index: 0, kind: input, shape index: {}]
  %s1 = inlined_call_operand.vmem [shape: bf16[8,128], index: 1, kind: input, shape index: {}]
  %s2 = inlined_call_operand.vmem [shape: bf16[8,128], index: 2, kind: input, shape index: {}]
  %s3 = inlined_call_operand.vmem [shape: bf16[128,128], index: 3, kind: input, shape index: {}]
  %s4 = inlined_call_operand.vmem [shape: f32[128,4], index: 4, kind: input, shape index: {}]
  %s5 = inlined_call_operand.vmem [shape: f32[1,4], index: 5, kind: input, shape index: {}]
  %s6 = inlined_call_operand.hbm [shape: f32[1,4], index: 6, kind: output, shape index: {}]
  %s7 = sld [smem:[#allocation0]]
  $region34: #{_fused_forward.1} parent=0
    _
  %s9 = ssub.s32 1, %s7
  %s10 = scalar_select 0, %s9, %s7
  $region1: #{_fused_forward.1} parent=0
    #allocation2 [shape = 'u8[512]{0}', space=vmem, size = 0x400, scoped, tag = 'output window, operand 0, single buffered']
    #allocation3 [shape = 's32[1]{0}', space=sflag, size = 0x4, scoped, tag = 'scoped memory for _fused_forward.1']
    %11 = vsyncpa [#allocation3], 0
    // Predicated region
    $region2: #{_fused_forward.1} parent=1 // pred_check
      _
    $region3: #{_fused_forward.1} parent=1 // pred_check_branch
      %13 = sbr.rel (0) target = $region5
    $region4: #{_fused_forward.1} parent=1 // pred_region
      _
    $region5: #{_fused_forward.1} parent=1 // pred_fallthru
      _
    // Predicated region
    $region6: #{_fused_forward.1} parent=1 // pred_check
      _
    $region7: #{_fused_forward.1} parent=1 // pred_check_branch
      %15 = sbr.rel (0) target = $region9
    $region8: #{_fused_forward.1} parent=1 // pred_region
      _
    $region9: #{_fused_forward.1} parent=1 // pred_fallthru
      _
    // Predicated region
    $region10: #{_fused_forward.1} parent=1 // pred_check
      _
    $region11: #{_fused_forward.1} parent=1 // pred_check_branch
      %17 = sbr.rel (0) target = $region13
    $region12: #{_fused_forward.1} parent=1 // pred_region
      _
    $region13: #{_fused_forward.1} parent=1 // pred_fallthru
      _
    // Predicated region
    $region14: #{_fused_forward.1} parent=1 // pred_check
      _
    $region15: #{_fused_forward.1} parent=1 // pred_check_branch
      %19 = sbr.rel (0) target = $region17
    $region16: #{_fused_forward.1} parent=1 // pred_region
      _
    $region17: #{_fused_forward.1} parent=1 // pred_fallthru
      _
    // Predicated region
    $region18: #{_fused_forward.1} parent=1 // pred_check
      _
    $region19: #{_fused_forward.1} parent=1 // pred_check_branch
      %21 = sbr.rel (0) target = $region21
    $region20: #{_fused_forward.1} parent=1 // pred_region
      _
    $region21: #{_fused_forward.1} parent=1 // pred_fallthru
      _
    // Predicated region
    $region22: #{_fused_forward.1} parent=1 // pred_check
      _
    $region23: #{_fused_forward.1} parent=1 // pred_check_branch
      %23 = sbr.rel (0) target = $region25
    $region24: #{_fused_forward.1} parent=1 // pred_region
      _
    $region25: #{_fused_forward.1} parent=1 // pred_fallthru
      _
    %v24 = vld [vmem:[%s0] sm:$0xf]
    %v25 = vld [vmem:[%s3] sm:$0xf]
    %v26 = vld [vmem:[%s3 + $0x4] sm:$0xf]
    %v27 = vld [vmem:[%s3 + $0x8] sm:$0xf]
    %v28 = vld [vmem:[%s3 + $0xc] sm:$0xf]
    %v29 = vld [vmem:[%s3 + $0x10] sm:$0xf]
    %v30 = vld [vmem:[%s3 + $0x14] sm:$0xf]
    %v31 = vld [vmem:[%s3 + $0x18] sm:$0xf]
    %v32 = vld [vmem:[%s3 + $0x1c] sm:$0xf]
    %v33 = vld [vmem:[%s3 + $0x20] sm:$0xf]
    %v34 = vld [vmem:[%s3 + $0x24] sm:$0xf]
    %v35 = vld [vmem:[%s3 + $0x28] sm:$0xf]
    %v36 = vld [vmem:[%s3 + $0x2c] sm:$0xf]
    %v37 = vld [vmem:[%s3 + $0x30] sm:$0xf]
    %v38 = vld [vmem:[%s3 + $0x34] sm:$0xf]
    %v39 = vld [vmem:[%s3 + $0x38] sm:$0xf]
    %v40 = vld [vmem:[%s3 + $0x3c] sm:$0xf]
    %v57 = vunpack.c.l.b16 %v25
    %v58 = vunpack.c.l.b16 %v26
    %v59 = vunpack.c.l.b16 %v27
    %v60 = vunpack.c.l.b16 %v28
    %v61 = vunpack.c.l.b16 %v29
    %v62 = vunpack.c.l.b16 %v30
    %v63 = vunpack.c.l.b16 %v31
    %v64 = vunpack.c.l.b16 %v32
    %v65 = vunpack.c.l.b16 %v33
    %v66 = vunpack.c.l.b16 %v34
    %v67 = vunpack.c.l.b16 %v35
    %v68 = vunpack.c.l.b16 %v36
    %v69 = vunpack.c.l.b16 %v37
    %v70 = vunpack.c.l.b16 %v38
    %v71 = vunpack.c.l.b16 %v39
    %v72 = vunpack.c.l.b16 %v40
    %v73 = vpack.c.b16 %v58, %v57
    %v74 = vpack.c.b16 %v60, %v59
    %v75 = vpack.c.b16 %v62, %v61
    %v76 = vpack.c.b16 %v64, %v63
    %v77 = vpack.c.b16 %v66, %v65
    %v78 = vpack.c.b16 %v68, %v67
    %v79 = vpack.c.b16 %v70, %v69
    %v80 = vpack.c.b16 %v72, %v71
    %89 = vmatpush.bf16.msra.mxu0 %v80
    %90 = vmatpush.bf16.msra.mxu0 %v79
    %91 = vmatpush.bf16.msra.mxu0 %v78
    %92 = vmatpush.bf16.msra.mxu0 %v77
    %93 = vmatpush.bf16.msra.mxu0 %v76
    %94 = vmatpush.bf16.msra.mxu0 %v75
    %95 = vmatpush.bf16.msra.mxu0 %v74
    %96 = vmatpush.bf16.msra.mxu0 %v73
    %97 = vmatmul.bf16.gmra.mxu0 %v24
    %v98 = vpop.f32.mrf.mxu0
    %v99 = vadd.f32 0.0, %v98
    %v100 = vpop.f32.mrf.mxu0
    %101 = vdwg.mxu0
    %v102 = vld [vmem:[%s1] sm:$0xf]
    %v103 = vunpack.c.l.bf16 %v102
    %v104 = vld [vmem:[%s2] sm:$0xf]
    %v105 = vunpack.c.l.bf16 %v104
    %v106 = vld [vmem:[%s4] sm:$0xff]
    %v107 = vld [vmem:[%s4 + $0x8] sm:$0xff]
    %v108 = vld [vmem:[%s4 + $0x10] sm:$0xff]
    %v109 = vld [vmem:[%s4 + $0x18] sm:$0xff]
    %v110 = vld [vmem:[%s4 + $0x20] sm:$0xff]
    %v111 = vld [vmem:[%s4 + $0x28] sm:$0xff]
    %v112 = vld [vmem:[%s4 + $0x30] sm:$0xff]
    %v113 = vld [vmem:[%s4 + $0x38] sm:$0xff]
    %v114 = vld [vmem:[%s4 + $0x40] sm:$0xff]
    %v115 = vld [vmem:[%s4 + $0x48] sm:$0xff]
    %v116 = vld [vmem:[%s4 + $0x50] sm:$0xff]
    %v117 = vld [vmem:[%s4 + $0x58] sm:$0xff]
    %v118 = vld [vmem:[%s4 + $0x60] sm:$0xff]
    %v119 = vld [vmem:[%s4 + $0x68] sm:$0xff]
    %v120 = vld [vmem:[%s4 + $0x70] sm:$0xff]
    %v121 = vld [vmem:[%s4 + $0x78] sm:$0xff]
    %v122 = vld [vmem:[%s5] sm:$0x1]
    %v123 = vmul.f32 %v99, %v103
    %v125 = vperm.slane %v122, 0
    %127 = vmatpush.msra.mxu0 %v121
    %128 = vmatpush.msra.mxu0 %v120
    %129 = vmatpush.msra.mxu0 %v119
    %130 = vmatpush.msra.mxu0 %v118
    %131 = vmatpush.msra.mxu0 %v117
    %132 = vmatpush.msra.mxu0 %v116
    %133 = vmatpush.msra.mxu0 %v115
    %134 = vmatpush.msra.mxu0 %v114
    %135 = vmatpush.msra.mxu0 %v113
    %136 = vmatpush.msra.mxu0 %v112
    %137 = vmatpush.msra.mxu0 %v111
    %138 = vmatpush.msra.mxu0 %v110
    %139 = vmatpush.msra.mxu0 %v109
    %140 = vmatpush.msra.mxu0 %v108
    %141 = vmatpush.msra.mxu0 %v107
    %142 = vmatpush.msra.mxu0 %v106
    %143 = vmatmul.f32.gmra.mxu0 %v123
    %v144 = vpop.f32.mrf.mxu0
    %v145 = vadd.f32 %v125, %v144
    %146 = vdwg.mxu0
    %v147 = vmul.f32 %v99, %v105
    %148 = vmatpush.msra.mxu0 %v121
    %149 = vmatpush.msra.mxu0 %v120
    %150 = vmatpush.msra.mxu0 %v119
    %151 = vmatpush.msra.mxu0 %v118
    %152 = vmatpush.msra.mxu0 %v117
    %153 = vmatpush.msra.mxu0 %v116
    %154 = vmatpush.msra.mxu0 %v115
    %155 = vmatpush.msra.mxu0 %v114
    %156 = vmatpush.msra.mxu0 %v113
    %157 = vmatpush.msra.mxu0 %v112
    %158 = vmatpush.msra.mxu0 %v111
    %159 = vmatpush.msra.mxu0 %v110
    %160 = vmatpush.msra.mxu0 %v109
    %161 = vmatpush.msra.mxu0 %v108
    %162 = vmatpush.msra.mxu0 %v107
    %163 = vmatpush.msra.mxu0 %v106
    %164 = vmatmul.f32.gmra.mxu0 %v147
    %v165 = vpop.f32.mrf.mxu0
    %v166 = vadd.f32 %v125, %v165
    %167 = vdwg.mxu0
    %v168 = vsub.f32 0.0, %v145
    %v169 = vmax.f32 %v168, 0.0
    %v170 = vand.u32 2147483647, %v168
    %v171 = vsub.f32 0.0, %v170
    %v172 = vmul.f32 %v171, 1.442695
    %v173 = vpow.pop %v172
    %v174 = vadd.f32 %v173, 1.0
    %v175 = vlog2.pop %v174
    %v176 = vmul.f32 %v175, 0.6931472
    %v177 = vmul.f32 -0.5, %v173
    %v178 = vadd.f32 %v177, 1.0
    %v179 = vmul.f32 %v178, %v173
    %v180 = vand.u32 2147483647, %v173
    %vm181 = vcmp.lt.f32.partialorder %v180, 0.0004427343
    %v182 = vsel %vm181, %v179, %v176
    %v183 = vadd.f32 %v169, %v182
    %vm184 = vcmask 31744
    %v185 = vsel %vm184, %v183, 0.0
    %v186 = vrot.slane %v185, 4
    %v187 = vadd.f32 %v185, %v186
    %v188 = vrot.slane %v187, 2
    %v189 = vadd.f32 %v187, %v188
    %v190 = vrot.slane %v189, 1
    %v191 = vadd.f32 %v189, %v190
    %v192 = vmax.f32 %v166, 0.0
    %v193 = vand.u32 2147483647, %v166
    %v194 = vsub.f32 0.0, %v193
    %v195 = vmul.f32 %v194, 1.442695
    %v196 = vpow.pop %v195
    %v197 = vadd.f32 %v196, 1.0
    %v198 = vlog2.pop %v197
    %v199 = vmul.f32 %v198, 0.6931472
    %v200 = vmul.f32 -0.5, %v196
    %v201 = vadd.f32 %v200, 1.0
    %v202 = vmul.f32 %v201, %v196
    %v203 = vand.u32 2147483647, %v196
    %vm204 = vcmp.lt.f32.partialorder %v203, 0.0004427343
    %v205 = vsel %vm204, %v202, %v199
    %v206 = vadd.f32 %v192, %v205
    %v207 = vsel %vm184, %v206, 0.0
    %v208 = vrot.slane %v207, 4
    %v209 = vadd.f32 %v207, %v208
    %v210 = vrot.slane %v209, 2
    %v211 = vadd.f32 %v209, %v210
    %v212 = vrot.slane %v211, 1
    %v213 = vadd.f32 %v211, %v212
    %v214 = vadd.f32 %v191, %v213
    %v215 = vrcp.pop 16.0
    %v216 = vmul.f32 16.0, %v215
    %v217 = vsub.f32 1.0, %v216
    %v218 = vmul.f32 %v215, %v217
    %v219 = vadd.f32 %v215, %v218
    %vm220 = vweird.f32 %v215
    %v221 = vsel %vm220, %v215, %v219
    %v222 = vmul.f32 %v214, %v221
    %vm223 = vcmask 24576
    %224 = vst.msk [vmem:[#allocation2] sm:$0x1] %vm223, %v222
    // Predicated region
    $region26: #{_fused_forward.1} parent=1 // pred_check
      _
    $region27: #{_fused_forward.1} parent=1 // pred_check_branch
      %226 = sbr.rel (0) target = $region29
    $region28: #{_fused_forward.1} parent=1 // pred_region
      %228 = vsyncadd [#allocation3], 0
      %s230 = sshll.u32 [#allocation2], 4
      %s231 = int_to_ptr.vmem [resolvable:$true] %s230
      %s232 = sshll.u32 %s6, 4
      %s233 = int_to_ptr.hbm [resolvable:$true] %s232
      %235 = dma.vmem_to_hbm [thread:$0]  %s231, 16, %s233, [#allocation3]
    $region29: #{_fused_forward.1} parent=1 // pred_fallthru
      _
    // Predicated region
    $region30: #{_fused_forward.1} parent=1 // pred_check
      _
    $region31: #{_fused_forward.1} parent=1 // pred_check_branch
      %237 = sbr.rel (0) target = $region33
    $region32: #{_fused_forward.1} parent=1 // pred_region
      %239 = dma.done [#allocation3], 16
    $region33: #{_fused_forward.1} parent=1 // pred_fallthru
      _
    %240 = vsyncpa [#allocation3], 1

</llo_original>
